<compile_context>
chip_gen: v6e
topology: v6e:2x2x1
jax: 0.10.0
libtpu: 0.0.40
codegen_flags: <defaults>
</compile_context>

<pallas_src>
import functools

import jax
import jax.numpy as jnp
from jax.experimental import pallas as pl
from jax.experimental.pallas import tpu as pltpu

LANES = 128
CHUNK = 256                     # rows per inner accumulation chunk (bounds vreg pressure)
SMOOTH = 1.0
BLOCK_BYTES_DEFAULT = 4 << 20   # ~4 MiB per input block on v6e / v7x
BLOCK_BYTES_V5E = 2 << 20       # keep 2 inputs x 2 buffers well under v5e's 16 MiB scoped VMEM


def _round_up(a, b):
    return ((a + b - 1) // b) * b


def _device_flags():
    try:
        kind = jax.devices()[0].device_kind.lower()
    except Exception:
        kind = ""
    is_v5e = ("v5e" in kind) or ("v5 lite" in kind) or ("v5lite" in kind)
    is_v7 = ("v7" in kind) or ("tpu7" in kind)
    return is_v5e, is_v7


def _dice_kernel(x_ref, y_ref, o_ref, inter_acc, sum_acc, *, tm, steps, rows_valid):
    p = pl.program_id(0)          # partition (TensorCore) index
    i = pl.program_id(1)          # reduction step within the partition

    @pl.when(i == 0)
    def _init():
        inter_acc[...] = jnp.zeros_like(inter_acc)
        sum_acc[...] = jnp.zeros_like(sum_acc)

    b = p * steps + i             # logical (unclamped) row-block index
    block_row0 = b * tm
    n_chunks = tm // CHUNK

    def accumulate(xv, yv):
        prod = (xv * yv).reshape(CHUNK // 8, 8, LANES)
        both = (xv + yv).reshape(CHUNK // 8, 8, LANES)
        inter_acc[...] += jnp.sum(prod, axis=0)   # (8,128) f32 partials, pure VPU
        sum_acc[...] += jnp.sum(both, axis=0)

    def body_full(c, carry):
        off = pl.multiple_of(c * CHUNK, CHUNK)
        xv = x_ref[pl.ds(off, CHUNK), :].astype(jnp.float32)
        yv = y_ref[pl.ds(off, CHUNK), :].astype(jnp.float32)
        accumulate(xv, yv)
        return carry

    def body_masked(c, carry):
        off = pl.multiple_of(c * CHUNK, CHUNK)
        xv = x_ref[pl.ds(off, CHUNK), :].astype(jnp.float32)
        yv = y_ref[pl.ds(off, CHUNK), :].astype(jnp.float32)
        # (CHUNK,1) sublane iota; lane broadcast is free (all lanes of a valid row are valid).
        row_ids = jax.lax.broadcasted_iota(jnp.int32, (CHUNK, 1), 0) + (block_row0 + off)
        valid = row_ids < rows_valid
        # jnp.where (not mask*value): undefined rows of a partial DMA may be NaN/Inf.
        accumulate(jnp.where(valid, xv, 0.0), jnp.where(valid, yv, 0.0))
        return carry

    block_full = (b + 1) * tm <= rows_valid

    @pl.when(block_full)
    def _fast_path():             # steady state: no masking, pure DMA + VPU
        jax.lax.fori_loop(0, n_chunks, body_full, 0)

    @pl.when(jnp.logical_not(block_full))
    def _masked_path():           # ragged last block / phantom block of uneven split
        jax.lax.fori_loop(0, n_chunks, body_masked, 0)

    @pl.when(i == pl.num_programs(1) - 1)
    def _emit():
        o_ref[0, 0] = inter_acc[...]
        o_ref[0, 1] = sum_acc[...]


def _prep(a):
    """Flatten; bool -> int8 (1 B/elem stream); split lane-aligned prefix and tiny tail."""
    a = jnp.ravel(a)
    if a.dtype == jnp.bool_:
        a = a.astype(jnp.int8)            # stream 1-byte labels; cast to f32 in-kernel
    n = a.shape[0]
    n_main = (n // LANES) * LANES
    main = a[:n_main].reshape(-1, LANES) if n_main else None
    tail = a[n_main:]                     # < 128 elements, handled in plain JAX
    return main, tail


def dice_loss(inp, label):
    """1 - dice_coeff(inp, label); matches the PyTorch reference (smooth=1)."""
    assert inp.size == label.size, "input and label must have the same numel"

    x2d, x_tail = _prep(inp)
    y2d, y_tail = _prep(label)

    intersection = jnp.float32(0.0)
    total = jnp.float32(0.0)

    if x_tail.shape[0]:                   # ragged <128-element tail: tiny JAX op, no pad copy
        xt = x_tail.astype(jnp.float32)
        yt = y_tail.astype(jnp.float32)
        intersection = intersection + jnp.sum(xt * yt)
        total = total + jnp.sum(xt) + jnp.sum(yt)

    if x2d is not None:
        rows = x2d.shape[0]
        is_v5e, is_v7 = _device_flags()

        # Dtype-aware row tile: fixed byte budget for the widest input block.
        budget = BLOCK_BYTES_V5E if is_v5e else BLOCK_BYTES_DEFAULT
        itemsize = max(jnp.dtype(x2d.dtype).itemsize, jnp.dtype(y2d.dtype).itemsize)
        tm_cap = max(CHUNK, (budget // (LANES * itemsize)) // CHUNK * CHUNK)
        tm = min(tm_cap, _round_up(rows, CHUNK))
        assert tm % CHUNK == 0

        total_blocks = pl.cdiv(rows, tm)
        # 2-way split only on v7x (2 TensorCores); single-TC chips gain nothing from it.
        nparts = 2 if (is_v7 and total_blocks >= 2) else 1
        steps = pl.cdiv(total_blocks, nparts)

        def in_map(p, i):
            # clamp phantom blocks of an uneven 2-way split; fully masked in-kernel.
            return (jnp.minimum(p * steps + i, total_blocks - 1), 0)

        kernel = functools.partial(_dice_kernel, tm=tm, steps=steps, rows_valid=rows)

        n_elems = rows * LANES
        cost = pl.CostEstimate(
            flops=4 * n_elems,
            transcendentals=0,
            bytes_accessed=n_elems * (jnp.dtype(x2d.dtype).itemsize
                                      + jnp.dtype(y2d.dtype).itemsize),
        )

        partials = pl.pallas_call(
            kernel,
            out_shape=jax.ShapeDtypeStruct((nparts, 2, 8, LANES), jnp.float32),
            grid_spec=pltpu.PrefetchScalarGridSpec(
                num_scalar_prefetch=0,
                grid=(nparts, steps),
                in_specs=[
                    pl.BlockSpec((tm, LANES), in_map),
                    pl.BlockSpec((tm, LANES), in_map),
                ],
                out_specs=pl.BlockSpec((1, 2, 8, LANES), lambda p, i: (p, 0, 0, 0)),
                scratch_shapes=[
                    pltpu.VMEM((8, LANES), jnp.float32),   # sum(x*y) partials
                    pltpu.VMEM((8, LANES), jnp.float32),   # sum(x)+sum(y) partials
                ],
            ),
            compiler_params=pltpu.CompilerParams(
                # TODO(synk): verify on v7x that the leading "parallel" axis really
                # shards across both TensorCores; if not, switch it to CORE_PARALLEL.
                dimension_semantics=("parallel", "arbitrary"),
            ),
            cost_estimate=cost,
        )(x2d, y2d)

        intersection = intersection + jnp.sum(partials[:, 0])
        total = total + jnp.sum(partials[:, 1])      # = sum(x) + sum(y)

    dice = (2.0 * intersection + SMOOTH) / (total + SMOOTH)
    return (1.0 - dice).astype(jnp.float32)


if __name__ == "__main__":
    key = jax.random.PRNGKey(0)
    k1, k2, k3 = jax.random.split(key, 3)
    smooth = 1.0

    # NCHW-style segmentation inputs: predictions in [0,1], binary labels.
    x = jax.nn.sigmoid(jax.random.normal(k1, (2, 4, 16, 16), dtype=jnp.float32))
    lbl = (jax.random.uniform(k2, (2, 4, 16, 16)) > 0.5).astype(jnp.float32)

    loss = jax.block_until_ready(dice_loss(x, lbl))
    xf, lf = x.ravel(), lbl.ravel()
    ref = 1.0 - (2.0 * jnp.sum(xf * lf) + smooth) / (jnp.sum(xf) + jnp.sum(lf) + smooth)
    assert jnp.allclose(loss, ref, atol=1e-5, rtol=1e-5), (loss, ref)

    # Bool-label path: streamed as int8, cast to f32 inside the kernel.
    lbl_bool = jax.random.uniform(k3, (2, 4, 16, 16)) > 0.5
    loss_b = jax.block_until_ready(dice_loss(x, lbl_bool))
    lbf = lbl_bool.astype(jnp.float32).ravel()
    ref_b = 1.0 - (2.0 * jnp.sum(xf * lbf) + smooth) / (jnp.sum(xf) + jnp.sum(lbf) + smooth)
    assert jnp.allclose(loss_b, ref_b, atol=1e-5, rtol=1e-5), (loss_b, ref_b)

    # Ragged numel (not a multiple of 128): aligned prefix via kernel + tiny JAX tail.
    x3 = jax.nn.sigmoid(jax.random.normal(k1, (3, 7, 100), dtype=jnp.float32))
    l3 = (jax.random.uniform(k2, (3, 7, 100)) > 0.5).astype(jnp.float32)
    loss3 = jax.block_until_ready(dice_loss(x3, l3))
    x3f, l3f = x3.ravel(), l3.ravel()
    ref3 = 1.0 - (2.0 * jnp.sum(x3f * l3f) + smooth) / (jnp.sum(x3f) + jnp.sum(l3f) + smooth)
    assert jnp.allclose(loss3, ref3, atol=1e-5, rtol=1e-5), (loss3, ref3)

    print("KERNEL_OK")
</pallas_src>

<mosaic_0001>
module attributes {stable_mosaic.version = 11 : i64} {
  func.func @_dice_kernel(%arg0: i32, %arg1: i32, %arg2: memref<256x128xf32, #tpu.memory_space<vmem>>, %arg3: memref<256x128xf32, #tpu.memory_space<vmem>>, %arg4: memref<1x2x8x128xf32, #tpu.memory_space<vmem>>, %arg5: memref<8x128xf32, #tpu.memory_space<vmem>>, %arg6: memref<8x128xf32, #tpu.memory_space<vmem>>) attributes {dimension_semantics = [#tpu.dimension_semantics<parallel>, #tpu.dimension_semantics<arbitrary>], iteration_bounds = array<i64: 1, 1>, scalar_prefetch = 0 : i64, scratch_operands = 2 : i64, tpu.core_type = #tpu.core_type<tc>, window_params = [{transform_indices = @transform_0, window_bounds = array<i64: 256, 128>}, {transform_indices = @transform_1, window_bounds = array<i64: 256, 128>}, {transform_indices = @transform_2, window_bounds = array<i64: 1, 2, 8, 128>}]} {
    %c0_i32 = arith.constant 0 : i32
    %0 = arith.cmpi eq, %arg1, %c0_i32 : i32
    %1 = arith.extui %0 : i1 to i32
    %c0_i32_0 = arith.constant 0 : i32
    %2 = arith.cmpi ne, %1, %c0_i32_0 : i32
    scf.if %2 {
      %cst = arith.constant 0.000000e+00 : f32
      %17 = vector.broadcast %cst : f32 to vector<8x128xf32>
      %c0 = arith.constant 0 : index
      %c0_7 = arith.constant 0 : index
      %18 = vector.load %arg5[%c0, %c0_7] : memref<8x128xf32, #tpu.memory_space<vmem>>, vector<8x128xf32>
      tpu.vector_store %arg5[%c0, %c0_7], %17 {strides = array<i32>} : memref<8x128xf32, #tpu.memory_space<vmem>>, vector<8x128xf32>,
      %cst_8 = arith.constant 0.000000e+00 : f32
      %19 = vector.broadcast %cst_8 : f32 to vector<8x128xf32>
      %c0_9 = arith.constant 0 : index
      %c0_10 = arith.constant 0 : index
      %20 = vector.load %arg6[%c0_9, %c0_10] : memref<8x128xf32, #tpu.memory_space<vmem>>, vector<8x128xf32>
      tpu.vector_store %arg6[%c0_9, %c0_10], %19 {strides = array<i32>} : memref<8x128xf32, #tpu.memory_space<vmem>>, vector<8x128xf32>,
    } else {
    }
    %c1_i32 = arith.constant 1 : i32
    %3 = arith.muli %arg0, %c1_i32 : i32
    %4 = arith.addi %3, %arg1 : i32
    %c256_i32 = arith.constant 256 : i32
    %5 = arith.muli %4, %c256_i32 : i32
    %c1_i32_1 = arith.constant 1 : i32
    %6 = arith.addi %4, %c1_i32_1 : i32
    %c256_i32_2 = arith.constant 256 : i32
    %7 = arith.muli %6, %c256_i32_2 : i32
    %c16_i32 = arith.constant 16 : i32
    %8 = arith.cmpi sle, %7, %c16_i32 : i32
    %9 = arith.extui %8 : i1 to i32
    %c0_i32_3 = arith.constant 0 : i32
    %10 = arith.cmpi ne, %9, %c0_i32_3 : i32
    scf.if %10 {
      %c0_i32_7 = arith.constant 0 : i32
      %c256_i32_8 = arith.constant 256 : i32
      %17 = arith.muli %c0_i32_7, %c256_i32_8 : i32
      %18 = tpu.assume_multiple %17, 256 : i32
      %19 = arith.index_cast %18 : i32 to index
      %c0 = arith.constant 0 : index
      %20 = vector.load %arg2[%19, %c0] : memref<256x128xf32, #tpu.memory_space<vmem>>, vector<256x128xf32>
      %21 = arith.index_cast %18 : i32 to index
      %c0_9 = arith.constant 0 : index
      %22 = vector.load %arg3[%21, %c0_9] : memref<256x128xf32, #tpu.memory_space<vmem>>, vector<256x128xf32>
      %23 = arith.mulf %20, %22 : vector<256x128xf32>
      %24 = vector.shape_cast %23 : vector<256x128xf32> to vector<32x8x128xf32>
      %25 = arith.addf %20, %22 : vector<256x128xf32>
      %26 = vector.shape_cast %25 : vector<256x128xf32> to vector<32x8x128xf32>
      %c0_10 = arith.constant 0 : index
      %c0_11 = arith.constant 0 : index
      %27 = vector.load %arg5[%c0_10, %c0_11] : memref<8x128xf32, #tpu.memory_space<vmem>>, vector<8x128xf32>
      %cst = arith.constant dense<0.000000e+00> : vector<8x128xf32>
      %28 = vector.multi_reduction <add>, %24, %cst [0] : vector<32x8x128xf32> to vector<8x128xf32>
      %29 = arith.addf %27, %28 : vector<8x128xf32>
      %c0_12 = arith.constant 0 : index
      %c0_13 = arith.constant 0 : index
      %30 = vector.load %arg5[%c0_12, %c0_13] : memref<8x128xf32, #tpu.memory_space<vmem>>, vector<8x128xf32>
      tpu.vector_store %arg5[%c0_12, %c0_13], %29 {strides = array<i32>} : memref<8x128xf32, #tpu.memory_space<vmem>>, vector<8x128xf32>,
      %c0_14 = arith.constant 0 : index
      %c0_15 = arith.constant 0 : index
      %31 = vector.load %arg6[%c0_14, %c0_15] : memref<8x128xf32, #tpu.memory_space<vmem>>, vector<8x128xf32>
      %cst_16 = arith.constant dense<0.000000e+00> : vector<8x128xf32>
      %32 = vector.multi_reduction <add>, %26, %cst_16 [0] : vector<32x8x128xf32> to vector<8x128xf32>
      %33 = arith.addf %31, %32 : vector<8x128xf32>
      %c0_17 = arith.constant 0 : index
      %c0_18 = arith.constant 0 : index
      %34 = vector.load %arg6[%c0_17, %c0_18] : memref<8x128xf32, #tpu.memory_space<vmem>>, vector<8x128xf32>
      tpu.vector_store %arg6[%c0_17, %c0_18], %33 {strides = array<i32>} : memref<8x128xf32, #tpu.memory_space<vmem>>, vector<8x128xf32>,
      %c1_i32_19 = arith.constant 1 : i32
    } else {
    }
    %true = arith.constant true
    %11 = arith.xori %8, %true : i1
    %12 = arith.extui %11 : i1 to i32
    %c0_i32_4 = arith.constant 0 : i32
    %13 = arith.cmpi ne, %12, %c0_i32_4 : i32
    scf.if %13 {
      %c0_i32_7 = arith.constant 0 : i32
      %c256_i32_8 = arith.constant 256 : i32
      %17 = arith.muli %c0_i32_7, %c256_i32_8 : i32
      %18 = tpu.assume_multiple %17, 256 : i32
      %19 = arith.index_cast %18 : i32 to index
      %c0 = arith.constant 0 : index
      %20 = vector.load %arg2[%19, %c0] : memref<256x128xf32, #tpu.memory_space<vmem>>, vector<256x128xf32>
      %21 = arith.index_cast %18 : i32 to index
      %c0_9 = arith.constant 0 : index
      %22 = vector.load %arg3[%21, %c0_9] : memref<256x128xf32, #tpu.memory_space<vmem>>, vector<256x128xf32>
      %23 = tpu.iota {dimensions = array<i32: 0>} : vector<256x1xi32>
      %24 = arith.addi %5, %18 : i32
      %25 = vector.broadcast %24 : i32 to vector<256x1xi32>
      %26 = arith.addi %23, %25 : vector<256x1xi32>
      %c16_i32_10 = arith.constant 16 : i32
      %27 = vector.broadcast %c16_i32_10 : i32 to vector<256x1xi32>
      %28 = arith.cmpi slt, %26, %27 : vector<256x1xi32>
      %cst = arith.constant 0.000000e+00 : f32
      %29 = vector.shape_cast %28 : vector<256x1xi1> to vector<256x1xi1>
      %30 = vector.broadcast %29 : vector<256x1xi1> to vector<256x128xi1>
      %31 = vector.broadcast %cst : f32 to vector<256x128xf32>
      %32 = arith.select %30, %20, %31 : vector<256x128xi1>, vector<256x128xf32>
      %cst_11 = arith.constant 0.000000e+00 : f32
      %33 = vector.shape_cast %28 : vector<256x1xi1> to vector<256x1xi1>
      %34 = vector.broadcast %33 : vector<256x1xi1> to vector<256x128xi1>
      %35 = vector.broadcast %cst_11 : f32 to vector<256x128xf32>
      %36 = arith.select %34, %22, %35 : vector<256x128xi1>, vector<256x128xf32>
      %37 = arith.mulf %32, %36 : vector<256x128xf32>
      %38 = vector.shape_cast %37 : vector<256x128xf32> to vector<32x8x128xf32>
      %39 = arith.addf %32, %36 : vector<256x128xf32>
      %40 = vector.shape_cast %39 : vector<256x128xf32> to vector<32x8x128xf32>
      %c0_12 = arith.constant 0 : index
      %c0_13 = arith.constant 0 : index
      %41 = vector.load %arg5[%c0_12, %c0_13] : memref<8x128xf32, #tpu.memory_space<vmem>>, vector<8x128xf32>
      %cst_14 = arith.constant dense<0.000000e+00> : vector<8x128xf32>
      %42 = vector.multi_reduction <add>, %38, %cst_14 [0] : vector<32x8x128xf32> to vector<8x128xf32>
      %43 = arith.addf %41, %42 : vector<8x128xf32>
      %c0_15 = arith.constant 0 : index
      %c0_16 = arith.constant 0 : index
      %44 = vector.load %arg5[%c0_15, %c0_16] : memref<8x128xf32, #tpu.memory_space<vmem>>, vector<8x128xf32>
      tpu.vector_store %arg5[%c0_15, %c0_16], %43 {strides = array<i32>} : memref<8x128xf32, #tpu.memory_space<vmem>>, vector<8x128xf32>,
      %c0_17 = arith.constant 0 : index
      %c0_18 = arith.constant 0 : index
      %45 = vector.load %arg6[%c0_17, %c0_18] : memref<8x128xf32, #tpu.memory_space<vmem>>, vector<8x128xf32>
      %cst_19 = arith.constant dense<0.000000e+00> : vector<8x128xf32>
      %46 = vector.multi_reduction <add>, %40, %cst_19 [0] : vector<32x8x128xf32> to vector<8x128xf32>
      %47 = arith.addf %45, %46 : vector<8x128xf32>
      %c0_20 = arith.constant 0 : index
      %c0_21 = arith.constant 0 : index
      %48 = vector.load %arg6[%c0_20, %c0_21] : memref<8x128xf32, #tpu.memory_space<vmem>>, vector<8x128xf32>
      tpu.vector_store %arg6[%c0_20, %c0_21], %47 {strides = array<i32>} : memref<8x128xf32, #tpu.memory_space<vmem>>, vector<8x128xf32>,
      %c1_i32_22 = arith.constant 1 : i32
    } else {
    }
    %c0_i32_5 = arith.constant 0 : i32
    %14 = arith.cmpi eq, %arg1, %c0_i32_5 : i32
    %15 = arith.extui %14 : i1 to i32
    %c0_i32_6 = arith.constant 0 : i32
    %16 = arith.cmpi ne, %15, %c0_i32_6 : i32
    scf.if %16 {
      %c0 = arith.constant 0 : index
      %c0_7 = arith.constant 0 : index
      %17 = vector.load %arg5[%c0, %c0_7] : memref<8x128xf32, #tpu.memory_space<vmem>>, vector<8x128xf32>
      %c0_8 = arith.constant 0 : index
      %c0_9 = arith.constant 0 : index
      %c0_10 = arith.constant 0 : index
      %c0_11 = arith.constant 0 : index
      %18 = vector.load %arg4[%c0_8, %c0_9, %c0_10, %c0_11] : memref<1x2x8x128xf32, #tpu.memory_space<vmem>>, vector<1x1x8x128xf32>
      %19 = vector.shape_cast %18 : vector<1x1x8x128xf32> to vector<8x128xf32>
      %20 = vector.shape_cast %17 : vector<8x128xf32> to vector<1x1x8x128xf32>
      tpu.vector_store %arg4[%c0_8, %c0_9, %c0_10, %c0_11], %20 {strides = array<i32>} : memref<1x2x8x128xf32, #tpu.memory_space<vmem>>, vector<1x1x8x128xf32>,
      %c0_12 = arith.constant 0 : index
      %c0_13 = arith.constant 0 : index
      %21 = vector.load %arg6[%c0_12, %c0_13] : memref<8x128xf32, #tpu.memory_space<vmem>>, vector<8x128xf32>
      %c0_14 = arith.constant 0 : index
      %c1 = arith.constant 1 : index
      %c0_15 = arith.constant 0 : index
      %c0_16 = arith.constant 0 : index
      %22 = vector.load %arg4[%c0_14, %c1, %c0_15, %c0_16] : memref<1x2x8x128xf32, #tpu.memory_space<vmem>>, vector<1x1x8x128xf32>
      %23 = vector.shape_cast %22 : vector<1x1x8x128xf32> to vector<8x128xf32>
      %24 = vector.shape_cast %21 : vector<8x128xf32> to vector<1x1x8x128xf32>
      tpu.vector_store %arg4[%c0_14, %c1, %c0_15, %c0_16], %24 {strides = array<i32>} : memref<1x2x8x128xf32, #tpu.memory_space<vmem>>, vector<1x1x8x128xf32>,
    } else {
    }
    return
  }
  func.func @transform_0(%arg0: i32, %arg1: i32) -> (i32, i32) {
    %c1_i32 = arith.constant 1 : i32
    %0 = arith.muli %arg0, %c1_i32 : i32
    %1 = arith.addi %0, %arg1 : i32
    %c0_i32 = arith.constant 0 : i32
    %2 = arith.minsi %1, %c0_i32 : i32
    %c0_i32_0 = arith.constant 0 : i32
    %c0_i32_1 = arith.constant 0 : i32
    return %2, %c0_i32_0 : i32, i32
  }
  func.func @transform_1(%arg0: i32, %arg1: i32) -> (i32, i32) {
    %c1_i32 = arith.constant 1 : i32
    %0 = arith.muli %arg0, %c1_i32 : i32
    %1 = arith.addi %0, %arg1 : i32
    %c0_i32 = arith.constant 0 : i32
    %2 = arith.minsi %1, %c0_i32 : i32
    %c0_i32_0 = arith.constant 0 : i32
    %c0_i32_1 = arith.constant 0 : i32
    return %2, %c0_i32_0 : i32, i32
  }
  func.func @transform_2(%arg0: i32, %arg1: i32) -> (i32, i32, i32, i32) {
    %c0_i32 = arith.constant 0 : i32
    %c0_i32_0 = arith.constant 0 : i32
    %c0_i32_1 = arith.constant 0 : i32
    %c0_i32_2 = arith.constant 0 : i32
    return %arg0, %c0_i32, %c0_i32_0, %c0_i32_1 : i32, i32, i32, i32
  }
}

</mosaic_0001>

<llo_original>
// kernel: tpu_custom_call.1
$region0: #{tpu_custom_call.1}
  #allocation0 [shape = 'u32[]', space=smem, size = 0x4, offset = 0x4, fixed_abs, tag = 'smem constant byte address 0x4 - core index']
  #allocation1 [shape = 'u32[144,128]{1,0:T(1,128)}', space=vmem, size = 0x12000, scoped, tag = 'internal scratch']
  #allocation2 [shape = 'f32[8,128]{1,0:T(8,128)}', space=vmem, size = 0x1000, scoped, tag = 'scratch operand']
  #allocation3 [shape = 'f32[8,128]{1,0:T(8,128)}', space=vmem, size = 0x1000, scoped, tag = 'scratch operand']
  %s0 = inlined_call_operand.hbm [shape: f32[16,128], index: 0, kind: input, shape index: {}]
  %s1 = inlined_call_operand.hbm [shape: f32[16,128], index: 1, kind: input, shape index: {}]
  %s2 = inlined_call_operand.hbm [shape: f32[1,2,8,128], index: 2, kind: output, shape index: {}]
  %s3 = sld [smem:[#allocation0]]
  $region42: #{tpu_custom_call.1} parent=0
    _
  %s5 = ssub.s32 1, %s3
  %s6 = scalar_select 0, %s5, %s3
  $region1: #{tpu_custom_call.1} parent=0
    #allocation4 [shape = 'u8[131072]{0}', space=vmem, size = 0x20000, scoped, tag = 'input window, operand 0, single buffered']
    #allocation5 [shape = 's32[1]{0}', space=sflag, size = 0x4, scoped, tag = 'scoped memory for tpu_custom_call.1']
    #allocation6 [shape = 's32[1]{0}', space=sflag, size = 0x4, scoped, tag = 'scoped memory for tpu_custom_call.1']
    #allocation7 [shape = 'u8[131072]{0}', space=vmem, size = 0x20000, scoped, tag = 'input window, operand 1, single buffered']
    #allocation8 [shape = 's32[1]{0}', space=sflag, size = 0x4, scoped, tag = 'scoped memory for tpu_custom_call.1']
    #allocation9 [shape = 'u8[8192]{0}', space=vmem, size = 0x2000, scoped, tag = 'output window, operand 0, single buffered']
    %7 = vsyncpa [#allocation5], 0
    %8 = vsyncpa [#allocation8], 0
    %9 = vsyncpa [#allocation6], 0
    // Predicated region
    $region2: #{tpu_custom_call.1} parent=1 // pred_check
      _
    $region3: #{tpu_custom_call.1} parent=1 // pred_check_branch
      %11 = sbr.rel (0) target = $region5
    $region4: #{tpu_custom_call.1} parent=1 // pred_region
      %s12 = sadd.s32 0, 0
      %p13 = scmp.lt.s32.totalorder %s12, 0
      %s14 = scalar_select %p13, %s12, 0
      %s15 = smul.u32 32, %s14
      %s16 = ssub.s32 2, %s15
      %s17 = smul.u32 128, %s16
      %s19 = ssub.s32 4096, %s17
      %20 = vsyncadd [#allocation5], %s19
      %p21 = scmp.ne.s32.totalorder 0, %s17
      %s22 = smul.addr %s15, 128
      %s23 = scalar_lea.hbm %s0, %s22
      %s24 = smul.u32 8, %s16
      %s25 = sshll.u32 [#allocation4], 4
      %s26 = int_to_ptr.vmem [resolvable:$true] %s25
      %s27 = sshll.u32 %s24, 4
      %31 = dma.hbm_to_vmem [thread:$0]  (%p21), %s23, %s27, %s26, [#allocation5], 128, 128, 8
    $region5: #{tpu_custom_call.1} parent=1 // pred_fallthru
      _
    // Predicated region
    $region6: #{tpu_custom_call.1} parent=1 // pred_check
      _
    $region7: #{tpu_custom_call.1} parent=1 // pred_check_branch
      %33 = sbr.rel (0) target = $region9
    $region8: #{tpu_custom_call.1} parent=1 // pred_region
      %s34 = sadd.s32 0, 0
      %p35 = scmp.lt.s32.totalorder %s34, 0
      %s36 = scalar_select %p35, %s34, 0
      %s37 = smul.u32 32, %s36
      %s38 = ssub.s32 2, %s37
      %s39 = smul.u32 128, %s38
      %s41 = ssub.s32 4096, %s39
      %42 = vsyncadd [#allocation8], %s41
      %p43 = scmp.ne.s32.totalorder 0, %s39
      %s44 = smul.addr %s37, 128
      %s45 = scalar_lea.hbm %s1, %s44
      %s46 = smul.u32 8, %s38
      %s47 = sshll.u32 [#allocation7], 4
      %s48 = int_to_ptr.vmem [resolvable:$true] %s47
      %s49 = sshll.u32 %s46, 4
      %53 = dma.hbm_to_vmem [thread:$0]  (%p43), %s45, %s49, %s48, [#allocation8], 128, 128, 8
    $region9: #{tpu_custom_call.1} parent=1 // pred_fallthru
      _
    // Predicated region
    $region10: #{tpu_custom_call.1} parent=1 // pred_check
      _
    $region11: #{tpu_custom_call.1} parent=1 // pred_check_branch
      %55 = sbr.rel (0) target = $region13
    $region12: #{tpu_custom_call.1} parent=1 // pred_region
      %56 = dma.done [#allocation5], 4096
    $region13: #{tpu_custom_call.1} parent=1 // pred_fallthru
      _
    // Predicated region
    $region14: #{tpu_custom_call.1} parent=1 // pred_check
      _
    $region15: #{tpu_custom_call.1} parent=1 // pred_check_branch
      %58 = sbr.rel (0) target = $region17
    $region16: #{tpu_custom_call.1} parent=1 // pred_region
      %59 = dma.done [#allocation8], 4096
    $region17: #{tpu_custom_call.1} parent=1 // pred_fallthru
      _
    %s60 = sadd.s32 0, 0
    %p61 = scmp.lt.s32.totalorder %s60, 0
    %s62 = scalar_select %p61, %s60, 0
    %s63 = smul.u32 32, %s62
    %s64 = ssub.s32 2, %s63
    %s65 = smul.u32 128, %s64
    %s66 = sadd.s32 0, 0
    %p67 = scmp.lt.s32.totalorder %s66, 0
    %s68 = scalar_select %p67, %s66, 0
    %s69 = smul.u32 32, %s68
    %s70 = ssub.s32 2, %s69
    %s71 = smul.u32 128, %s70
    %p72 = scmp.eq.s32.totalorder 0, 0
    // Predicated region
    $region18: #{tpu_custom_call.1} parent=1 // pred_check
      %p73 = pneg %p72
    $region19: #{tpu_custom_call.1} parent=1 // pred_check_branch
      %75 = sbr.rel (%p73) target = $region21
    $region20: #{tpu_custom_call.1} parent=1 // pred_region
      %76 = vst [vmem:[#allocation2] sm:$0xff] 0.0
      %77 = vst [vmem:[#allocation3] sm:$0xff] 0.0
    $region21: #{tpu_custom_call.1} parent=1 // pred_fallthru
      _
    %s78 = sadd.s32 0, 0
    %s79 = smul.u32 %s78, 256
    %s80 = sadd.s32 %s78, 1
    %s81 = smul.u32 %s80, 256
    %p82 = scmp.le.s32.totalorder %s81, 16
    // Predicated region
    $region22: #{tpu_custom_call.1} parent=1 // pred_check
      %p83 = pneg %p82
    $region23: #{tpu_custom_call.1} parent=1 // pred_check_branch
      %85 = sbr.rel (%p83) target = $region25
    $region24: #{tpu_custom_call.1} parent=1 // pred_region
      %v86 = vld [vmem:[#allocation4] sm:$0xff]
      %v87 = vld [vmem:[#allocation4 + $0x8] sm:$0xff]
      %v88 = vld [vmem:[#allocation4 + $0x10] sm:$0xff]
      %v89 = vld [vmem:[#allocation4 + $0x18] sm:$0xff]
      %v90 = vld [vmem:[#allocation4 + $0x20] sm:$0xff]
      %v91 = vld [vmem:[#allocation4 + $0x28] sm:$0xff]
      %v92 = vld [vmem:[#allocation4 + $0x30] sm:$0xff]
      %v93 = vld [vmem:[#allocation4 + $0x38] sm:$0xff]
      %v94 = vld [vmem:[#allocation4 + $0x40] sm:$0xff]
      %v95 = vld [vmem:[#allocation4 + $0x48] sm:$0xff]
      %v96 = vld [vmem:[#allocation4 + $0x50] sm:$0xff]
      %v97 = vld [vmem:[#allocation4 + $0x58] sm:$0xff]
      %v98 = vld [vmem:[#allocation4 + $0x60] sm:$0xff]
      %v99 = vld [vmem:[#allocation4 + $0x68] sm:$0xff]
      %v100 = vld [vmem:[#allocation4 + $0x70] sm:$0xff]
      %v101 = vld [vmem:[#allocation4 + $0x78] sm:$0xff]
      %v102 = vld [vmem:[#allocation4 + $0x80] sm:$0xff]
      %v103 = vld [vmem:[#allocation4 + $0x88] sm:$0xff]
      %v104 = vld [vmem:[#allocation4 + $0x90] sm:$0xff]
      %v105 = vld [vmem:[#allocation4 + $0x98] sm:$0xff]
      %v106 = vld [vmem:[#allocation4 + $0xa0] sm:$0xff]
      %v107 = vld [vmem:[#allocation4 + $0xa8] sm:$0xff]
      %v108 = vld [vmem:[#allocation4 + $0xb0] sm:$0xff]
      %v109 = vld [vmem:[#allocation4 + $0xb8] sm:$0xff]
      %v110 = vld [vmem:[#allocation4 + $0xc0] sm:$0xff]
      %v111 = vld [vmem:[#allocation4 + $0xc8] sm:$0xff]
      %v112 = vld [vmem:[#allocation4 + $0xd0] sm:$0xff]
      %v113 = vld [vmem:[#allocation4 + $0xd8] sm:$0xff]
      %v114 = vld [vmem:[#allocation4 + $0xe0] sm:$0xff]
      %v115 = vld [vmem:[#allocation4 + $0xe8] sm:$0xff]
      %v116 = vld [vmem:[#allocation4 + $0xf0] sm:$0xff]
      %v117 = vld [vmem:[#allocation4 + $0xf8] sm:$0xff]
      %v118 = vld [vmem:[#allocation7] sm:$0xff]
      %v119 = vld [vmem:[#allocation7 + $0x8] sm:$0xff]
      %v120 = vld [vmem:[#allocation7 + $0x10] sm:$0xff]
      %v121 = vld [vmem:[#allocation7 + $0x18] sm:$0xff]
      %v122 = vld [vmem:[#allocation7 + $0x20] sm:$0xff]
      %v123 = vld [vmem:[#allocation7 + $0x28] sm:$0xff]
      %v124 = vld [vmem:[#allocation7 + $0x30] sm:$0xff]
      %v125 = vld [vmem:[#allocation7 + $0x38] sm:$0xff]
      %v126 = vld [vmem:[#allocation7 + $0x40] sm:$0xff]
      %v127 = vld [vmem:[#allocation7 + $0x48] sm:$0xff]
      %v128 = vld [vmem:[#allocation7 + $0x50] sm:$0xff]
      %v129 = vld [vmem:[#allocation7 + $0x58] sm:$0xff]
      %v130 = vld [vmem:[#allocation7 + $0x60] sm:$0xff]
      %v131 = vld [vmem:[#allocation7 + $0x68] sm:$0xff]
      %v132 = vld [vmem:[#allocation7 + $0x70] sm:$0xff]
      %v133 = vld [vmem:[#allocation7 + $0x78] sm:$0xff]
      %v134 = vld [vmem:[#allocation7 + $0x80] sm:$0xff]
      %v135 = vld [vmem:[#allocation7 + $0x88] sm:$0xff]
      %v136 = vld [vmem:[#allocation7 + $0x90] sm:$0xff]
      %v137 = vld [vmem:[#allocation7 + $0x98] sm:$0xff]
      %v138 = vld [vmem:[#allocation7 + $0xa0] sm:$0xff]
      %v139 = vld [vmem:[#allocation7 + $0xa8] sm:$0xff]
      %v140 = vld [vmem:[#allocation7 + $0xb0] sm:$0xff]
      %v141 = vld [vmem:[#allocation7 + $0xb8] sm:$0xff]
      %v142 = vld [vmem:[#allocation7 + $0xc0] sm:$0xff]
      %v143 = vld [vmem:[#allocation7 + $0xc8] sm:$0xff]
      %v144 = vld [vmem:[#allocation7 + $0xd0] sm:$0xff]
      %v145 = vld [vmem:[#allocation7 + $0xd8] sm:$0xff]
      %v146 = vld [vmem:[#allocation7 + $0xe0] sm:$0xff]
      %v147 = vld [vmem:[#allocation7 + $0xe8] sm:$0xff]
      %v148 = vld [vmem:[#allocation7 + $0xf0] sm:$0xff]
      %v149 = vld [vmem:[#allocation7 + $0xf8] sm:$0xff]
      %v150 = vmul.f32 %v86, %v118
      %v151 = vmul.f32 %v87, %v119
      %v152 = vmul.f32 %v88, %v120
      %v153 = vmul.f32 %v89, %v121
      %v154 = vmul.f32 %v90, %v122
      %v155 = vmul.f32 %v91, %v123
      %v156 = vmul.f32 %v92, %v124
      %v157 = vmul.f32 %v93, %v125
      %v158 = vmul.f32 %v94, %v126
      %v159 = vmul.f32 %v95, %v127
      %v160 = vmul.f32 %v96, %v128
      %v161 = vmul.f32 %v97, %v129
      %v162 = vmul.f32 %v98, %v130
      %v163 = vmul.f32 %v99, %v131
      %v164 = vmul.f32 %v100, %v132
      %v165 = vmul.f32 %v101, %v133
      %v166 = vmul.f32 %v102, %v134
      %v167 = vmul.f32 %v103, %v135
      %v168 = vmul.f32 %v104, %v136
      %v169 = vmul.f32 %v105, %v137
      %v170 = vmul.f32 %v106, %v138
      %v171 = vmul.f32 %v107, %v139
      %v172 = vmul.f32 %v108, %v140
      %v173 = vmul.f32 %v109, %v141
      %v174 = vmul.f32 %v110, %v142
      %v175 = vmul.f32 %v111, %v143
      %v176 = vmul.f32 %v112, %v144
      %v177 = vmul.f32 %v113, %v145
      %v178 = vmul.f32 %v114, %v146
      %v179 = vmul.f32 %v115, %v147
      %v180 = vmul.f32 %v116, %v148
      %v181 = vmul.f32 %v117, %v149
      %v182 = vadd.f32 %v86, %v118
      %v183 = vadd.f32 %v87, %v119
      %v184 = vadd.f32 %v88, %v120
      %v185 = vadd.f32 %v89, %v121
      %v186 = vadd.f32 %v90, %v122
      %v187 = vadd.f32 %v91, %v123
      %v188 = vadd.f32 %v92, %v124
      %v189 = vadd.f32 %v93, %v125
      %v190 = vadd.f32 %v94, %v126
      %v191 = vadd.f32 %v95, %v127
      %v192 = vadd.f32 %v96, %v128
      %v193 = vadd.f32 %v97, %v129
      %v194 = vadd.f32 %v98, %v130
      %v195 = vadd.f32 %v99, %v131
      %v196 = vadd.f32 %v100, %v132
      %v197 = vadd.f32 %v101, %v133
      %v198 = vadd.f32 %v102, %v134
      %v199 = vadd.f32 %v103, %v135
      %v200 = vadd.f32 %v104, %v136
      %v201 = vadd.f32 %v105, %v137
      %v202 = vadd.f32 %v106, %v138
      %v203 = vadd.f32 %v107, %v139
      %v204 = vadd.f32 %v108, %v140
      %v205 = vadd.f32 %v109, %v141
      %v206 = vadd.f32 %v110, %v142
      %v207 = vadd.f32 %v111, %v143
      %v208 = vadd.f32 %v112, %v144
      %v209 = vadd.f32 %v113, %v145
      %v210 = vadd.f32 %v114, %v146
      %v211 = vadd.f32 %v115, %v147
      %v212 = vadd.f32 %v116, %v148
      %v213 = vadd.f32 %v117, %v149
      %v214 = vld [vmem:[#allocation2] sm:$0xff]
      %v215 = vadd.f32 %v150, %v151
      %v216 = vadd.f32 %v215, %v152
      %v217 = vadd.f32 %v216, %v153
      %v218 = vadd.f32 %v217, %v154
      %v219 = vadd.f32 %v218, %v155
      %v220 = vadd.f32 %v219, %v156
      %v221 = vadd.f32 %v220, %v157
      %v222 = vadd.f32 %v221, %v158
      %v223 = vadd.f32 %v222, %v159
      %v224 = vadd.f32 %v223, %v160
      %v225 = vadd.f32 %v224, %v161
      %v226 = vadd.f32 %v225, %v162
      %v227 = vadd.f32 %v226, %v163
      %v228 = vadd.f32 %v227, %v164
      %v229 = vadd.f32 %v228, %v165
      %v230 = vadd.f32 %v229, %v166
      %v231 = vadd.f32 %v230, %v167
      %v232 = vadd.f32 %v231, %v168
      %v233 = vadd.f32 %v232, %v169
      %v234 = vadd.f32 %v233, %v170
      %v235 = vadd.f32 %v234, %v171
      %v236 = vadd.f32 %v235, %v172
      %v237 = vadd.f32 %v236, %v173
      %v238 = vadd.f32 %v237, %v174
      %v239 = vadd.f32 %v238, %v175
      %v240 = vadd.f32 %v239, %v176
      %v241 = vadd.f32 %v240, %v177
      %v242 = vadd.f32 %v241, %v178
      %v243 = vadd.f32 %v242, %v179
      %v244 = vadd.f32 %v243, %v180
      %v245 = vadd.f32 %v244, %v181
      %v246 = vadd.f32 %v214, %v245
      %247 = vst [vmem:[#allocation2] sm:$0xff] %v246
      %v248 = vld [vmem:[#allocation3] sm:$0xff]
      %v249 = vadd.f32 %v182, %v183
      %v250 = vadd.f32 %v249, %v184
      %v251 = vadd.f32 %v250, %v185
      %v252 = vadd.f32 %v251, %v186
      %v253 = vadd.f32 %v252, %v187
      %v254 = vadd.f32 %v253, %v188
      %v255 = vadd.f32 %v254, %v189
      %v256 = vadd.f32 %v255, %v190
      %v257 = vadd.f32 %v256, %v191
      %v258 = vadd.f32 %v257, %v192
      %v259 = vadd.f32 %v258, %v193
      %v260 = vadd.f32 %v259, %v194
      %v261 = vadd.f32 %v260, %v195
      %v262 = vadd.f32 %v261, %v196
      %v263 = vadd.f32 %v262, %v197
      %v264 = vadd.f32 %v263, %v198
      %v265 = vadd.f32 %v264, %v199
      %v266 = vadd.f32 %v265, %v200
      %v267 = vadd.f32 %v266, %v201
      %v268 = vadd.f32 %v267, %v202
      %v269 = vadd.f32 %v268, %v203
      %v270 = vadd.f32 %v269, %v204
      %v271 = vadd.f32 %v270, %v205
      %v272 = vadd.f32 %v271, %v206
      %v273 = vadd.f32 %v272, %v207
      %v274 = vadd.f32 %v273, %v208
      %v275 = vadd.f32 %v274, %v209
      %v276 = vadd.f32 %v275, %v210
      %v277 = vadd.f32 %v276, %v211
      %v278 = vadd.f32 %v277, %v212
      %v279 = vadd.f32 %v278, %v213
      %v280 = vadd.f32 %v248, %v279
      %281 = vst [vmem:[#allocation3] sm:$0xff] %v280
    $region25: #{tpu_custom_call.1} parent=1 // pred_fallthru
      _
    %p282 = scmp.gt.s32.totalorder %s81, 16
    // Predicated region
    $region26: #{tpu_custom_call.1} parent=1 // pred_check
      %p283 = pneg %p282
    $region27: #{tpu_custom_call.1} parent=1 // pred_check_branch
      %285 = sbr.rel (%p283) target = $region29
    $region28: #{tpu_custom_call.1} parent=1 // pred_region
      %v286 = vld [vmem:[#allocation4] sm:$0xff]
      %v287 = vld [vmem:[#allocation4 + $0x8] sm:$0xff]
      %v288 = vld [vmem:[#allocation4 + $0x10] sm:$0xff]
      %v289 = vld [vmem:[#allocation4 + $0x18] sm:$0xff]
      %v290 = vld [vmem:[#allocation4 + $0x20] sm:$0xff]
      %v291 = vld [vmem:[#allocation4 + $0x28] sm:$0xff]
      %v292 = vld [vmem:[#allocation4 + $0x30] sm:$0xff]
      %v293 = vld [vmem:[#allocation4 + $0x38] sm:$0xff]
      %v294 = vld [vmem:[#allocation4 + $0x40] sm:$0xff]
      %v295 = vld [vmem:[#allocation4 + $0x48] sm:$0xff]
      %v296 = vld [vmem:[#allocation4 + $0x50] sm:$0xff]
      %v297 = vld [vmem:[#allocation4 + $0x58] sm:$0xff]
      %v298 = vld [vmem:[#allocation4 + $0x60] sm:$0xff]
      %v299 = vld [vmem:[#allocation4 + $0x68] sm:$0xff]
      %v300 = vld [vmem:[#allocation4 + $0x70] sm:$0xff]
      %v301 = vld [vmem:[#allocation4 + $0x78] sm:$0xff]
      %v302 = vld [vmem:[#allocation4 + $0x80] sm:$0xff]
      %v303 = vld [vmem:[#allocation4 + $0x88] sm:$0xff]
      %v304 = vld [vmem:[#allocation4 + $0x90] sm:$0xff]
      %v305 = vld [vmem:[#allocation4 + $0x98] sm:$0xff]
      %v306 = vld [vmem:[#allocation4 + $0xa0] sm:$0xff]
      %v307 = vld [vmem:[#allocation4 + $0xa8] sm:$0xff]
      %v308 = vld [vmem:[#allocation4 + $0xb0] sm:$0xff]
      %v309 = vld [vmem:[#allocation4 + $0xb8] sm:$0xff]
      %v310 = vld [vmem:[#allocation4 + $0xc0] sm:$0xff]
      %v311 = vld [vmem:[#allocation4 + $0xc8] sm:$0xff]
      %v312 = vld [vmem:[#allocation4 + $0xd0] sm:$0xff]
      %v313 = vld [vmem:[#allocation4 + $0xd8] sm:$0xff]
      %v314 = vld [vmem:[#allocation4 + $0xe0] sm:$0xff]
      %v315 = vld [vmem:[#allocation4 + $0xe8] sm:$0xff]
      %v316 = vld [vmem:[#allocation4 + $0xf0] sm:$0xff]
      %v317 = vld [vmem:[#allocation4 + $0xf8] sm:$0xff]
      %v318 = vld [vmem:[#allocation7] sm:$0xff]
      %v319 = vld [vmem:[#allocation7 + $0x8] sm:$0xff]
      %v320 = vld [vmem:[#allocation7 + $0x10] sm:$0xff]
      %v321 = vld [vmem:[#allocation7 + $0x18] sm:$0xff]
      %v322 = vld [vmem:[#allocation7 + $0x20] sm:$0xff]
      %v323 = vld [vmem:[#allocation7 + $0x28] sm:$0xff]
      %v324 = vld [vmem:[#allocation7 + $0x30] sm:$0xff]
      %v325 = vld [vmem:[#allocation7 + $0x38] sm:$0xff]
      %v326 = vld [vmem:[#allocation7 + $0x40] sm:$0xff]
      %v327 = vld [vmem:[#allocation7 + $0x48] sm:$0xff]
      %v328 = vld [vmem:[#allocation7 + $0x50] sm:$0xff]
      %v329 = vld [vmem:[#allocation7 + $0x58] sm:$0xff]
      %v330 = vld [vmem:[#allocation7 + $0x60] sm:$0xff]
      %v331 = vld [vmem:[#allocation7 + $0x68] sm:$0xff]
      %v332 = vld [vmem:[#allocation7 + $0x70] sm:$0xff]
      %v333 = vld [vmem:[#allocation7 + $0x78] sm:$0xff]
      %v334 = vld [vmem:[#allocation7 + $0x80] sm:$0xff]
      %v335 = vld [vmem:[#allocation7 + $0x88] sm:$0xff]
      %v336 = vld [vmem:[#allocation7 + $0x90] sm:$0xff]
      %v337 = vld [vmem:[#allocation7 + $0x98] sm:$0xff]
      %v338 = vld [vmem:[#allocation7 + $0xa0] sm:$0xff]
      %v339 = vld [vmem:[#allocation7 + $0xa8] sm:$0xff]
      %v340 = vld [vmem:[#allocation7 + $0xb0] sm:$0xff]
      %v341 = vld [vmem:[#allocation7 + $0xb8] sm:$0xff]
      %v342 = vld [vmem:[#allocation7 + $0xc0] sm:$0xff]
      %v343 = vld [vmem:[#allocation7 + $0xc8] sm:$0xff]
      %v344 = vld [vmem:[#allocation7 + $0xd0] sm:$0xff]
      %v345 = vld [vmem:[#allocation7 + $0xd8] sm:$0xff]
      %v346 = vld [vmem:[#allocation7 + $0xe0] sm:$0xff]
      %v347 = vld [vmem:[#allocation7 + $0xe8] sm:$0xff]
      %v348 = vld [vmem:[#allocation7 + $0xf0] sm:$0xff]
      %v349 = vld [vmem:[#allocation7 + $0xf8] sm:$0xff]
      %v350 = vlaneseq
      %v351 = vshrl.u32 %v350, 7
      %v352 = vadd.s32 %v351, 8
      %v353 = vadd.s32 %v351, 16
      %v354 = vadd.s32 %v351, 24
      %v355 = vadd.s32 %v351, 32
      %v356 = vadd.s32 %v351, 40
      %v357 = vadd.s32 %v351, 48
      %v358 = vadd.s32 %v351, 56
      %v359 = vadd.s32 %v351, 64
      %v360 = vadd.s32 %v351, 72
      %v361 = vadd.s32 %v351, 80
      %v362 = vadd.s32 %v351, 88
      %v363 = vadd.s32 %v351, 96
      %v364 = vadd.s32 %v351, 104
      %v365 = vadd.s32 %v351, 112
      %v366 = vadd.s32 %v351, 120
      %v367 = vadd.s32 %v351, 128
      %v368 = vadd.s32 %v351, 136
      %v369 = vadd.s32 %v351, 144
      %v370 = vadd.s32 %v351, 152
      %v371 = vadd.s32 %v351, 160
      %v372 = vadd.s32 %v351, 168
      %v373 = vadd.s32 %v351, 176
      %v374 = vadd.s32 %v351, 184
      %v375 = vadd.s32 %v351, 192
      %v376 = vadd.s32 %v351, 200
      %v377 = vadd.s32 %v351, 208
      %v378 = vadd.s32 %v351, 216
      %v379 = vadd.s32 %v351, 224
      %v380 = vadd.s32 %v351, 232
      %v381 = vadd.s32 %v351, 240
      %v382 = vadd.s32 %v351, 248
      %s383 = sadd.s32 %s79, 0
      %v384 = vstv %s383
      %v385 = vadd.s32 %v351, %v384
      %v386 = vadd.s32 %v352, %v384
      %v387 = vadd.s32 %v353, %v384
      %v388 = vadd.s32 %v354, %v384
      %v389 = vadd.s32 %v355, %v384
      %v390 = vadd.s32 %v356, %v384
      %v391 = vadd.s32 %v357, %v384
      %v392 = vadd.s32 %v358, %v384
      %v393 = vadd.s32 %v359, %v384
      %v394 = vadd.s32 %v360, %v384
      %v395 = vadd.s32 %v361, %v384
      %v396 = vadd.s32 %v362, %v384
      %v397 = vadd.s32 %v363, %v384
      %v398 = vadd.s32 %v364, %v384
      %v399 = vadd.s32 %v365, %v384
      %v400 = vadd.s32 %v366, %v384
      %v401 = vadd.s32 %v367, %v384
      %v402 = vadd.s32 %v368, %v384
      %v403 = vadd.s32 %v369, %v384
      %v404 = vadd.s32 %v370, %v384
      %v405 = vadd.s32 %v371, %v384
      %v406 = vadd.s32 %v372, %v384
      %v407 = vadd.s32 %v373, %v384
      %v408 = vadd.s32 %v374, %v384
      %v409 = vadd.s32 %v375, %v384
      %v410 = vadd.s32 %v376, %v384
      %v411 = vadd.s32 %v377, %v384
      %v412 = vadd.s32 %v378, %v384
      %v413 = vadd.s32 %v379, %v384
      %v414 = vadd.s32 %v380, %v384
      %v415 = vadd.s32 %v381, %v384
      %v416 = vadd.s32 %v382, %v384
      %vm417 = vcmp.lt.s32.totalorder %v385, 16
      %vm418 = vcmp.lt.s32.totalorder %v386, 16
      %vm419 = vcmp.lt.s32.totalorder %v387, 16
      %vm420 = vcmp.lt.s32.totalorder %v388, 16
      %vm421 = vcmp.lt.s32.totalorder %v389, 16
      %vm422 = vcmp.lt.s32.totalorder %v390, 16
      %vm423 = vcmp.lt.s32.totalorder %v391, 16
      %vm424 = vcmp.lt.s32.totalorder %v392, 16
      %vm425 = vcmp.lt.s32.totalorder %v393, 16
      %vm426 = vcmp.lt.s32.totalorder %v394, 16
      %vm427 = vcmp.lt.s32.totalorder %v395, 16
      %vm428 = vcmp.lt.s32.totalorder %v396, 16
      %vm429 = vcmp.lt.s32.totalorder %v397, 16
      %vm430 = vcmp.lt.s32.totalorder %v398, 16
      %vm431 = vcmp.lt.s32.totalorder %v399, 16
      %vm432 = vcmp.lt.s32.totalorder %v400, 16
      %vm433 = vcmp.lt.s32.totalorder %v401, 16
      %vm434 = vcmp.lt.s32.totalorder %v402, 16
      %vm435 = vcmp.lt.s32.totalorder %v403, 16
      %vm436 = vcmp.lt.s32.totalorder %v404, 16
      %vm437 = vcmp.lt.s32.totalorder %v405, 16
      %vm438 = vcmp.lt.s32.totalorder %v406, 16
      %vm439 = vcmp.lt.s32.totalorder %v407, 16
      %vm440 = vcmp.lt.s32.totalorder %v408, 16
      %vm441 = vcmp.lt.s32.totalorder %v409, 16
      %vm442 = vcmp.lt.s32.totalorder %v410, 16
      %vm443 = vcmp.lt.s32.totalorder %v411, 16
      %vm444 = vcmp.lt.s32.totalorder %v412, 16
      %vm445 = vcmp.lt.s32.totalorder %v413, 16
      %vm446 = vcmp.lt.s32.totalorder %v414, 16
      %vm447 = vcmp.lt.s32.totalorder %v415, 16
      %vm448 = vcmp.lt.s32.totalorder %v416, 16
      %v449 = vsel %vm417, 1, 0
      %v450 = vsel %vm418, 1, 0
      %v451 = vsel %vm419, 1, 0
      %v452 = vsel %vm420, 1, 0
      %v453 = vsel %vm421, 1, 0
      %v454 = vsel %vm422, 1, 0
      %v455 = vsel %vm423, 1, 0
      %v456 = vsel %vm424, 1, 0
      %v457 = vsel %vm425, 1, 0
      %v458 = vsel %vm426, 1, 0
      %v459 = vsel %vm427, 1, 0
      %v460 = vsel %vm428, 1, 0
      %v461 = vsel %vm429, 1, 0
      %v462 = vsel %vm430, 1, 0
      %v463 = vsel %vm431, 1, 0
      %v464 = vsel %vm432, 1, 0
      %v465 = vsel %vm433, 1, 0
      %v466 = vsel %vm434, 1, 0
      %v467 = vsel %vm435, 1, 0
      %v468 = vsel %vm436, 1, 0
      %v469 = vsel %vm437, 1, 0
      %v470 = vsel %vm438, 1, 0
      %v471 = vsel %vm439, 1, 0
      %v472 = vsel %vm440, 1, 0
      %v473 = vsel %vm441, 1, 0
      %v474 = vsel %vm442, 1, 0
      %v475 = vsel %vm443, 1, 0
      %v476 = vsel %vm444, 1, 0
      %v477 = vsel %vm445, 1, 0
      %v478 = vsel %vm446, 1, 0
      %v479 = vsel %vm447, 1, 0
      %v480 = vsel %vm448, 1, 0
      %vm481 = vcmp.eq.s32.totalorder %v449, 1
      %vm482 = vcmp.eq.s32.totalorder %v450, 1
      %vm483 = vcmp.eq.s32.totalorder %v451, 1
      %vm484 = vcmp.eq.s32.totalorder %v452, 1
      %vm485 = vcmp.eq.s32.totalorder %v453, 1
      %vm486 = vcmp.eq.s32.totalorder %v454, 1
      %vm487 = vcmp.eq.s32.totalorder %v455, 1
      %vm488 = vcmp.eq.s32.totalorder %v456, 1
      %vm489 = vcmp.eq.s32.totalorder %v457, 1
      %vm490 = vcmp.eq.s32.totalorder %v458, 1
      %vm491 = vcmp.eq.s32.totalorder %v459, 1
      %vm492 = vcmp.eq.s32.totalorder %v460, 1
      %vm493 = vcmp.eq.s32.totalorder %v461, 1
      %vm494 = vcmp.eq.s32.totalorder %v462, 1
      %vm495 = vcmp.eq.s32.totalorder %v463, 1
      %vm496 = vcmp.eq.s32.totalorder %v464, 1
      %vm497 = vcmp.eq.s32.totalorder %v465, 1
      %vm498 = vcmp.eq.s32.totalorder %v466, 1
      %vm499 = vcmp.eq.s32.totalorder %v467, 1
      %vm500 = vcmp.eq.s32.totalorder %v468, 1
      %vm501 = vcmp.eq.s32.totalorder %v469, 1
      %vm502 = vcmp.eq.s32.totalorder %v470, 1
      %vm503 = vcmp.eq.s32.totalorder %v471, 1
      %vm504 = vcmp.eq.s32.totalorder %v472, 1
      %vm505 = vcmp.eq.s32.totalorder %v473, 1
      %vm506 = vcmp.eq.s32.totalorder %v474, 1
      %vm507 = vcmp.eq.s32.totalorder %v475, 1
      %vm508 = vcmp.eq.s32.totalorder %v476, 1
      %vm509 = vcmp.eq.s32.totalorder %v477, 1
      %vm510 = vcmp.eq.s32.totalorder %v478, 1
      %vm511 = vcmp.eq.s32.totalorder %v479, 1
      %vm512 = vcmp.eq.s32.totalorder %v480, 1
      %v513 = vsel %vm481, %v286, 0.0
      %v514 = vsel %vm482, %v287, 0.0
      %v515 = vsel %vm483, %v288, 0.0
      %v516 = vsel %vm484, %v289, 0.0
      %v517 = vsel %vm485, %v290, 0.0
      %v518 = vsel %vm486, %v291, 0.0
      %v519 = vsel %vm487, %v292, 0.0
      %v520 = vsel %vm488, %v293, 0.0
      %v521 = vsel %vm489, %v294, 0.0
      %v522 = vsel %vm490, %v295, 0.0
      %v523 = vsel %vm491, %v296, 0.0
      %v524 = vsel %vm492, %v297, 0.0
      %v525 = vsel %vm493, %v298, 0.0
      %v526 = vsel %vm494, %v299, 0.0
      %v527 = vsel %vm495, %v300, 0.0
      %v528 = vsel %vm496, %v301, 0.0
      %v529 = vsel %vm497, %v302, 0.0
      %v530 = vsel %vm498, %v303, 0.0
      %v531 = vsel %vm499, %v304, 0.0
      %v532 = vsel %vm500, %v305, 0.0
      %v533 = vsel %vm501, %v306, 0.0
      %v534 = vsel %vm502, %v307, 0.0
      %v535 = vsel %vm503, %v308, 0.0
      %v536 = vsel %vm504, %v309, 0.0
      %v537 = vsel %vm505, %v310, 0.0
      %v538 = vsel %vm506, %v311, 0.0
      %v539 = vsel %vm507, %v312, 0.0
      %v540 = vsel %vm508, %v313, 0.0
      %v541 = vsel %vm509, %v314, 0.0
      %v542 = vsel %vm510, %v315, 0.0
      %v543 = vsel %vm511, %v316, 0.0
      %v544 = vsel %vm512, %v317, 0.0
      %v545 = vsel %vm481, %v318, 0.0
      %v546 = vsel %vm482, %v319, 0.0
      %v547 = vsel %vm483, %v320, 0.0
      %v548 = vsel %vm484, %v321, 0.0
      %v549 = vsel %vm485, %v322, 0.0
      %v550 = vsel %vm486, %v323, 0.0
      %v551 = vsel %vm487, %v324, 0.0
      %v552 = vsel %vm488, %v325, 0.0
      %v553 = vsel %vm489, %v326, 0.0
      %v554 = vsel %vm490, %v327, 0.0
      %v555 = vsel %vm491, %v328, 0.0
      %v556 = vsel %vm492, %v329, 0.0
      %v557 = vsel %vm493, %v330, 0.0
      %v558 = vsel %vm494, %v331, 0.0
      %v559 = vsel %vm495, %v332, 0.0
      %v560 = vsel %vm496, %v333, 0.0
      %v561 = vsel %vm497, %v334, 0.0
      %v562 = vsel %vm498, %v335, 0.0
      %v563 = vsel %vm499, %v336, 0.0
      %v564 = vsel %vm500, %v337, 0.0
      %v565 = vsel %vm501, %v338, 0.0
      %v566 = vsel %vm502, %v339, 0.0
      %v567 = vsel %vm503, %v340, 0.0
      %v568 = vsel %vm504, %v341, 0.0
      %v569 = vsel %vm505, %v342, 0.0
      %v570 = vsel %vm506, %v343, 0.0
      %v571 = vsel %vm507, %v344, 0.0
      %v572 = vsel %vm508, %v345, 0.0
      %v573 = vsel %vm509, %v346, 0.0
      %v574 = vsel %vm510, %v347, 0.0
      %v575 = vsel %vm511, %v348, 0.0
      %v576 = vsel %vm512, %v349, 0.0
      %v577 = vmul.f32 %v513, %v545
      %v578 = vmul.f32 %v514, %v546
      %v579 = vmul.f32 %v515, %v547
      %v580 = vmul.f32 %v516, %v548
      %v581 = vmul.f32 %v517, %v549
      %v582 = vmul.f32 %v518, %v550
      %v583 = vmul.f32 %v519, %v551
      %v584 = vmul.f32 %v520, %v552
      %v585 = vmul.f32 %v521, %v553
      %v586 = vmul.f32 %v522, %v554
      %v587 = vmul.f32 %v523, %v555
      %v588 = vmul.f32 %v524, %v556
      %v589 = vmul.f32 %v525, %v557
      %v590 = vmul.f32 %v526, %v558
      %v591 = vmul.f32 %v527, %v559
      %v592 = vmul.f32 %v528, %v560
      %v593 = vmul.f32 %v529, %v561
      %v594 = vmul.f32 %v530, %v562
      %v595 = vmul.f32 %v531, %v563
      %v596 = vmul.f32 %v532, %v564
      %v597 = vmul.f32 %v533, %v565
      %v598 = vmul.f32 %v534, %v566
      %v599 = vmul.f32 %v535, %v567
      %v600 = vmul.f32 %v536, %v568
      %v601 = vmul.f32 %v537, %v569
      %v602 = vmul.f32 %v538, %v570
      %v603 = vmul.f32 %v539, %v571
      %v604 = vmul.f32 %v540, %v572
      %v605 = vmul.f32 %v541, %v573
      %v606 = vmul.f32 %v542, %v574
      %v607 = vmul.f32 %v543, %v575
      %v608 = vmul.f32 %v544, %v576
      %v609 = vadd.f32 %v513, %v545
      %v610 = vadd.f32 %v514, %v546
      %v611 = vadd.f32 %v515, %v547
      %v612 = vadd.f32 %v516, %v548
      %v613 = vadd.f32 %v517, %v549
      %v614 = vadd.f32 %v518, %v550
      %v615 = vadd.f32 %v519, %v551
      %v616 = vadd.f32 %v520, %v552
      %v617 = vadd.f32 %v521, %v553
      %v618 = vadd.f32 %v522, %v554
      %v619 = vadd.f32 %v523, %v555
      %v620 = vadd.f32 %v524, %v556
      %v621 = vadd.f32 %v525, %v557
      %v622 = vadd.f32 %v526, %v558
      %v623 = vadd.f32 %v527, %v559
      %v624 = vadd.f32 %v528, %v560
      %v625 = vadd.f32 %v529, %v561
      %v626 = vadd.f32 %v530, %v562
      %v627 = vadd.f32 %v531, %v563
      %v628 = vadd.f32 %v532, %v564
      %v629 = vadd.f32 %v533, %v565
      %v630 = vadd.f32 %v534, %v566
      %v631 = vadd.f32 %v535, %v567
      %v632 = vadd.f32 %v536, %v568
      %v633 = vadd.f32 %v537, %v569
      %v634 = vadd.f32 %v538, %v570
      %v635 = vadd.f32 %v539, %v571
      %v636 = vadd.f32 %v540, %v572
      %v637 = vadd.f32 %v541, %v573
      %v638 = vadd.f32 %v542, %v574
      %v639 = vadd.f32 %v543, %v575
      %v640 = vadd.f32 %v544, %v576
      %v641 = vld [vmem:[#allocation2] sm:$0xff]
      %v642 = vadd.f32 %v577, %v578
      %v643 = vadd.f32 %v642, %v579
      %v644 = vadd.f32 %v643, %v580
      %v645 = vadd.f32 %v644, %v581
      %v646 = vadd.f32 %v645, %v582
      %v647 = vadd.f32 %v646, %v583
      %v648 = vadd.f32 %v647, %v584
      %v649 = vadd.f32 %v648, %v585
      %v650 = vadd.f32 %v649, %v586
      %v651 = vadd.f32 %v650, %v587
      %v652 = vadd.f32 %v651, %v588
      %v653 = vadd.f32 %v652, %v589
      %v654 = vadd.f32 %v653, %v590
      %v655 = vadd.f32 %v654, %v591
      %v656 = vadd.f32 %v655, %v592
      %v657 = vadd.f32 %v656, %v593
      %v658 = vadd.f32 %v657, %v594
      %v659 = vadd.f32 %v658, %v595
      %v660 = vadd.f32 %v659, %v596
      %v661 = vadd.f32 %v660, %v597
      %v662 = vadd.f32 %v661, %v598
      %v663 = vadd.f32 %v662, %v599
      %v664 = vadd.f32 %v663, %v600
      %v665 = vadd.f32 %v664, %v601
      %v666 = vadd.f32 %v665, %v602
      %v667 = vadd.f32 %v666, %v603
      %v668 = vadd.f32 %v667, %v604
      %v669 = vadd.f32 %v668, %v605
      %v670 = vadd.f32 %v669, %v606
      %v671 = vadd.f32 %v670, %v607
      %v672 = vadd.f32 %v671, %v608
      %v673 = vadd.f32 %v641, %v672
      %674 = vst [vmem:[#allocation2] sm:$0xff] %v673
      %v675 = vld [vmem:[#allocation3] sm:$0xff]
      %v676 = vadd.f32 %v609, %v610
      %v677 = vadd.f32 %v676, %v611
      %v678 = vadd.f32 %v677, %v612
      %v679 = vadd.f32 %v678, %v613
      %v680 = vadd.f32 %v679, %v614
      %v681 = vadd.f32 %v680, %v615
      %v682 = vadd.f32 %v681, %v616
      %v683 = vadd.f32 %v682, %v617
      %v684 = vadd.f32 %v683, %v618
      %v685 = vadd.f32 %v684, %v619
      %v686 = vadd.f32 %v685, %v620
      %v687 = vadd.f32 %v686, %v621
      %v688 = vadd.f32 %v687, %v622
      %v689 = vadd.f32 %v688, %v623
      %v690 = vadd.f32 %v689, %v624
      %v691 = vadd.f32 %v690, %v625
      %v692 = vadd.f32 %v691, %v626
      %v693 = vadd.f32 %v692, %v627
      %v694 = vadd.f32 %v693, %v628
      %v695 = vadd.f32 %v694, %v629
      %v696 = vadd.f32 %v695, %v630
      %v697 = vadd.f32 %v696, %v631
      %v698 = vadd.f32 %v697, %v632
      %v699 = vadd.f32 %v698, %v633
      %v700 = vadd.f32 %v699, %v634
      %v701 = vadd.f32 %v700, %v635
      %v702 = vadd.f32 %v701, %v636
      %v703 = vadd.f32 %v702, %v637
      %v704 = vadd.f32 %v703, %v638
      %v705 = vadd.f32 %v704, %v639
      %v706 = vadd.f32 %v705, %v640
      %v707 = vadd.f32 %v675, %v706
      %708 = vst [vmem:[#allocation3] sm:$0xff] %v707
    $region29: #{tpu_custom_call.1} parent=1 // pred_fallthru
      _
    // Predicated region
    $region30: #{tpu_custom_call.1} parent=1 // pred_check
      %p709 = pneg %p72
    $region31: #{tpu_custom_call.1} parent=1 // pred_check_branch
      %711 = sbr.rel (%p709) target = $region33
    $region32: #{tpu_custom_call.1} parent=1 // pred_region
      %v712 = vld [vmem:[#allocation2] sm:$0xff]
      %713 = vst [vmem:[#allocation9] sm:$0xff] %v712
      %v714 = vld [vmem:[#allocation3] sm:$0xff]
      %s715 = scalar_lea.vmem [#allocation9], 8
      %716 = vst [vmem:[%s715] sm:$0xff] %v714
    $region33: #{tpu_custom_call.1} parent=1 // pred_fallthru
      _
    // Predicated region
    $region34: #{tpu_custom_call.1} parent=1 // pred_check
      _
    $region35: #{tpu_custom_call.1} parent=1 // pred_check_branch
      %718 = sbr.rel (0) target = $region37
    $region36: #{tpu_custom_call.1} parent=1 // pred_region
      %s720 = ssub.s32 256, 256
      %721 = vsyncadd [#allocation6], %s720
      %s722 = sshll.u32 [#allocation9], 4
      %s723 = int_to_ptr.vmem [resolvable:$true] %s722
      %728 = dma.vmem_to_hbm [thread:$0]  %s723, 256, %s2, [#allocation6], 128, 128, 8
    $region37: #{tpu_custom_call.1} parent=1 // pred_fallthru
      _
    // Predicated region
    $region38: #{tpu_custom_call.1} parent=1 // pred_check
      _
    $region39: #{tpu_custom_call.1} parent=1 // pred_check_branch
      %730 = sbr.rel (0) target = $region41
    $region40: #{tpu_custom_call.1} parent=1 // pred_region
      %731 = dma.done [#allocation6], 256
    $region41: #{tpu_custom_call.1} parent=1 // pred_fallthru
      _
    %732 = vsyncpa [#allocation5], 1
    %733 = vsyncpa [#allocation8], 1
    %734 = vsyncpa [#allocation6], 1

</llo_original>
